<compile_context>
chip_gen: v7x
topology: tpu7x:2x2x1
jax: 0.10.0
libtpu: 0.0.40
codegen_flags: <defaults>
</compile_context>

<pallas_src>
import functools

import jax
import jax.numpy as jnp
from jax.experimental import pallas as pl
from jax.experimental.pallas import tpu as pltpu

GAMMA = 0.8
ALPHA = 8.5


def _focal_loss_kernel(x_ref, t_ref, out_ref, *, gamma, alpha, n_valid,
                       tile_n, tail_shape):
    # x_ref:  (TILE_N, C) logits block
    # t_ref:  (TILE_N, 1) int32 class indices
    # out_ref:(1, 1, TAIL_COLS) f32 per-block, per-lane partial sums
    i = pl.program_id(0)

    x = x_ref[...].astype(jnp.float32)                                      # (T, C)
    t = t_ref[...]                                                          # (T, 1)

    # Numerically stable log-softmax pieces (row-wise, over the lane axis).
    m = jnp.max(x, axis=-1, keepdims=True)                                  # (T, 1)
    xs = x - m                                                              # (T, C)
    exp_xs = jnp.exp(xs)                                                    # (T, C)  main EUP cost
    col = jax.lax.broadcasted_iota(jnp.int32, x.shape, 1)                   # (T, C)
    onehot = col == t                                                       # (T, C)
    sum_exp = jnp.sum(exp_xs, axis=-1, keepdims=True)                       # (T, 1)
    picked = jnp.sum(jnp.where(onehot, xs, 0.0), axis=-1, keepdims=True)    # (T, 1)

    # Lane-densify the per-row tail before the transcendental chain: a (T, 1)
    # column uses 1/128 lanes per vreg, so log/exp/pow on it would cost ~4x the
    # EUP work of the main exp(xs).  The relayout goes through the XLU (slack).
    sum_exp_d = sum_exp.reshape(tail_shape)
    picked_d = picked.reshape(tail_shape)

    ce = jnp.log(sum_exp_d) - picked_d                                      # per-row cross entropy
    pt = jnp.exp(-ce)
    one_minus_pt = jnp.maximum(1.0 - pt, 0.0)   # guard: non-integer pow of a negative -> NaN
    focal = alpha * jnp.power(one_minus_pt, gamma) * ce

    # Mask rows past the true batch.  The last block may over-cover the array,
    # so the overhang can hold garbage / NaN: use a select, never a multiply.
    r0 = jax.lax.broadcasted_iota(jnp.int32, tail_shape, 0)
    r1 = jax.lax.broadcasted_iota(jnp.int32, tail_shape, 1)
    row = i * tile_n + r0 * tail_shape[1] + r1
    focal = jnp.where(row < n_valid, focal, 0.0)

    # Per-lane partial sums only; the cheap cross-lane reduce + mean scaling
    # happen once in the wrapper (lets the grid axis stay fully parallel).
    out_ref[...] = jnp.sum(focal, axis=0, keepdims=True).reshape(out_ref.shape)


def _round_up(x, m):
    return ((x + m - 1) // m) * m


def _vmem_plan():
    """Returns (target_tile_bytes, vmem_limit_bytes).

    Default is sized for v7x (64 MiB physical VMEM); bumped when the part
    reports >=100 MiB VMEM (v5e / v6e have 128 MiB).
    """
    try:
        info = pltpu.get_tpu_info()
        cap = getattr(info, "vmem_capacity_bytes", 0) or 0
        if cap >= 100 * 1024 * 1024:
            return 8 * 1024 * 1024, 96 * 1024 * 1024
    except Exception:
        pass
    return 4 * 1024 * 1024, 48 * 1024 * 1024


def _choose_tile_n(n, c, itemsize, target_tile_bytes):
    """Largest batch tile fitting the budget; multiple of 128 for the lane-dense tail.

    The per-row VMEM budget counts both the logits row (lanes padded to 128)
    and the lane-padded int32 target column (128 * 4 B per row, per buffer).
    Never returns a tile larger than the batch dim (no block > array dim).
    """
    if n <= 128:
        return n                                   # single full-extent block
    c_pad = _round_up(max(c, 128), 128)
    bytes_per_row = c_pad * itemsize + 4 * 128
    rows = int(target_tile_bytes // bytes_per_row)
    rows = max(128, (rows // 128) * 128)
    rows = min(rows, (n // 128) * 128)             # keep block <= array dim
    return rows


def focal_loss(logits, targets, *, gamma=GAMMA, alpha=ALPHA,
               reduction="mean", tile_n=None):
    """logits: (N, C) float32/bfloat16, targets: (N,) int -> scalar f32 focal loss."""
    n, c = logits.shape
    itemsize = jnp.dtype(logits.dtype).itemsize
    target_tile_bytes, vmem_limit = _vmem_plan()
    if tile_n is None:
        tile_n = _choose_tile_n(n, c, itemsize, target_tile_bytes)
    grid_n = (n + tile_n - 1) // tile_n

    # Logits are NOT padded: the grid over-covers the last block and the kernel
    # masks the overhang.  Targets are tiny, so pad them to whole tiles.
    n_pad_t = grid_n * tile_n
    t1d = targets.astype(jnp.int32)
    if n_pad_t != n:
        t1d = jnp.pad(t1d, ((0, n_pad_t - n),))
    t2d = t1d.reshape(n_pad_t, 1)

    tail_shape = (tile_n // 128, 128) if tile_n % 128 == 0 else (tile_n, 1)
    out_cols = tail_shape[1]

    kernel = functools.partial(
        _focal_loss_kernel,
        gamma=float(gamma),
        alpha=1.0 if alpha is None else float(alpha),
        n_valid=n,
        tile_n=tile_n,
        tail_shape=tail_shape,
    )

    partials = pl.pallas_call(
        kernel,
        out_shape=jax.ShapeDtypeStruct((grid_n, 1, out_cols), jnp.float32),
        grid_spec=pltpu.PrefetchScalarGridSpec(
            num_scalar_prefetch=0,
            grid=(grid_n,),
            in_specs=[
                pl.BlockSpec((tile_n, c), lambda i: (i, 0)),
                pl.BlockSpec((tile_n, 1), lambda i: (i, 0)),
            ],
            out_specs=pl.BlockSpec((1, 1, out_cols), lambda i: (i, 0, 0)),
        ),
        compiler_params=pltpu.CompilerParams(
            dimension_semantics=("parallel",),     # independent per-block partials
            vmem_limit_bytes=vmem_limit,
        ),
    )(logits, t2d)

    total = jnp.sum(partials)
    if reduction == "mean":
        return total / jnp.float32(n)
    elif reduction == "sum":
        return total
    else:
        # TODO(synk): reduction='none' per-sample output not implemented.
        raise NotImplementedError("only reduction='mean'/'sum' supported")


def _focal_loss_ref(logits, targets, *, gamma=GAMMA, alpha=ALPHA):
    logp = jax.nn.log_softmax(logits.astype(jnp.float32), axis=-1)
    ce = -jnp.take_along_axis(logp, targets[:, None].astype(jnp.int32), axis=-1)[:, 0]
    pt = jnp.exp(-ce)
    return jnp.mean(alpha * jnp.power(1.0 - pt, gamma) * ce)


if __name__ == "__main__":
    key = jax.random.PRNGKey(0)
    k1, k2, k3, k4 = jax.random.split(key, 4)

    # Case 1: module-sized example (batch=8, classes=32), f32, single small block.
    N, C = 8, 32
    logits = jax.random.normal(k1, (N, C), dtype=jnp.float32)
    targets = jax.random.randint(k2, (N,), 0, C, dtype=jnp.int32)
    loss = jax.block_until_ready(focal_loss(logits, targets))
    ref = jax.block_until_ready(_focal_loss_ref(logits, targets))
    assert jnp.allclose(loss, ref, rtol=1e-5, atol=1e-5), (loss, ref)

    # Case 2a: ragged N with the default tile (over-covering last block,
    # lane-dense tail, no logits padding in HBM).
    N2, C2 = 300, 100
    logits2 = jax.random.normal(k3, (N2, C2), dtype=jnp.float32)
    targets2 = jax.random.randint(k4, (N2,), 0, C2, dtype=jnp.int32)
    ref2 = jax.block_until_ready(_focal_loss_ref(logits2, targets2))
    loss2a = jax.block_until_ready(focal_loss(logits2, targets2))
    assert jnp.allclose(loss2a, ref2, rtol=1e-4, atol=1e-5), (loss2a, ref2)

    # Case 2b: forced multi-block grid (exercises parallel grid + masking).
    loss2b = jax.block_until_ready(focal_loss(logits2, targets2, tile_n=128))
    assert jnp.allclose(loss2b, ref2, rtol=1e-4, atol=1e-5), (loss2b, ref2)

    # Case 3: bf16 logits end-to-end (half the HBM bytes), f32 math inside.
    logits3 = logits2.astype(jnp.bfloat16)
    loss3 = jax.block_until_ready(focal_loss(logits3, targets2, tile_n=128))
    ref3 = jax.block_until_ready(_focal_loss_ref(logits3, targets2))
    assert jnp.allclose(loss3, ref3, rtol=1e-4, atol=1e-4), (loss3, ref3)

    # Case 4: reduction='sum'.
    loss4 = jax.block_until_ready(focal_loss(logits, targets, reduction="sum"))
    ref4 = jax.block_until_ready(_focal_loss_ref(logits, targets) * N)
    assert jnp.allclose(loss4, ref4, rtol=1e-5, atol=1e-4), (loss4, ref4)

    print("KERNEL_OK")
</pallas_src>

<mosaic_0001>
module attributes {stable_mosaic.version = 11 : i64} {
  func.func @_focal_loss_kernel(%arg0: i32, %arg1: memref<8x32xf32, #tpu.memory_space<vmem>>, %arg2: memref<8x1xi32, #tpu.memory_space<vmem>>, %arg3: memref<1x1x1xf32, #tpu.memory_space<vmem>>) attributes {dimension_semantics = [#tpu.dimension_semantics<parallel>], iteration_bounds = array<i64: 1>, scalar_prefetch = 0 : i64, scratch_operands = 0 : i64, tpu.core_type = #tpu.core_type<tc>, window_params = [{transform_indices = @transform_0, window_bounds = array<i64: 8, 32>}, {transform_indices = @transform_1, window_bounds = array<i64: 8, 1>}, {transform_indices = @transform_2, window_bounds = array<i64: 1, 1, 1>}]} {
    %c0 = arith.constant 0 : index
    %c0_0 = arith.constant 0 : index
    %0 = vector.load %arg1[%c0, %c0_0] : memref<8x32xf32, #tpu.memory_space<vmem>>, vector<8x32xf32>
    %c0_1 = arith.constant 0 : index
    %c0_2 = arith.constant 0 : index
    %1 = vector.load %arg2[%c0_1, %c0_2] : memref<8x1xi32, #tpu.memory_space<vmem>>, vector<8x1xi32>
    %cst = arith.constant dense<0xFF800000> : vector<8xf32>
    %2 = vector.multi_reduction <maximumf>, %0, %cst [1] : vector<8x32xf32> to vector<8xf32>
    %3 = vector.shape_cast %2 : vector<8xf32> to vector<8x1xf32>
    %4 = vector.broadcast %3 : vector<8x1xf32> to vector<8x32xf32>
    %5 = arith.subf %0, %4 : vector<8x32xf32>
    %6 = math.exp %5 : vector<8x32xf32>
    %7 = tpu.iota {dimensions = array<i32: 1>} : vector<8x32xi32>
    %8 = vector.broadcast %1 : vector<8x1xi32> to vector<8x32xi32>
    %9 = arith.cmpi eq, %7, %8 : vector<8x32xi32>
    %cst_3 = arith.constant dense<0.000000e+00> : vector<8xf32>
    %10 = vector.multi_reduction <add>, %6, %cst_3 [1] : vector<8x32xf32> to vector<8xf32>
    %11 = vector.shape_cast %10 : vector<8xf32> to vector<8x1xf32>
    %cst_4 = arith.constant 0.000000e+00 : f32
    %12 = vector.broadcast %cst_4 : f32 to vector<8x32xf32>
    %13 = arith.select %9, %5, %12 : vector<8x32xi1>, vector<8x32xf32>
    %cst_5 = arith.constant dense<0.000000e+00> : vector<8xf32>
    %14 = vector.multi_reduction <add>, %13, %cst_5 [1] : vector<8x32xf32> to vector<8xf32>
    %15 = vector.shape_cast %14 : vector<8xf32> to vector<8x1xf32>
    %16 = math.log %11 : vector<8x1xf32>
    %17 = arith.subf %16, %15 : vector<8x1xf32>
    %cst_6 = arith.constant 0.000000e+00 : f32
    %18 = vector.broadcast %cst_6 : f32 to vector<8x1xf32>
    %19 = arith.subf %18, %17 : vector<8x1xf32>
    %20 = math.exp %19 : vector<8x1xf32>
    %cst_7 = arith.constant 1.000000e+00 : f32
    %21 = vector.broadcast %cst_7 : f32 to vector<8x1xf32>
    %22 = arith.subf %21, %20 : vector<8x1xf32>
    %cst_8 = arith.constant 0.000000e+00 : f32
    %23 = vector.broadcast %cst_8 : f32 to vector<8x1xf32>
    %24 = arith.maximumf %22, %23 : vector<8x1xf32>
    %cst_9 = arith.constant 8.000000e-01 : f32
    %25 = vector.broadcast %cst_9 : f32 to vector<8x1xf32>
    %26 = math.powf %24, %25 : vector<8x1xf32>
    %cst_10 = arith.constant 8.500000e+00 : f32
    %27 = vector.broadcast %cst_10 : f32 to vector<8x1xf32>
    %28 = arith.mulf %27, %26 : vector<8x1xf32>
    %29 = arith.mulf %28, %17 : vector<8x1xf32>
    %30 = tpu.iota {dimensions = array<i32: 0>} : vector<8x1xi32>
    %31 = tpu.iota {dimensions = array<i32: 1>} : vector<8x1xi32>
    %c8_i32 = arith.constant 8 : i32
    %32 = arith.muli %arg0, %c8_i32 : i32
    %c1_i32 = arith.constant 1 : i32
    %33 = vector.broadcast %c1_i32 : i32 to vector<8x1xi32>
    %34 = arith.muli %30, %33 : vector<8x1xi32>
    %35 = vector.broadcast %32 : i32 to vector<8x1xi32>
    %36 = arith.addi %35, %34 : vector<8x1xi32>
    %37 = arith.addi %36, %31 : vector<8x1xi32>
    %c8_i32_11 = arith.constant 8 : i32
    %38 = vector.broadcast %c8_i32_11 : i32 to vector<8x1xi32>
    %39 = arith.cmpi slt, %37, %38 : vector<8x1xi32>
    %cst_12 = arith.constant 0.000000e+00 : f32
    %40 = vector.broadcast %cst_12 : f32 to vector<8x1xf32>
    %41 = arith.select %39, %29, %40 : vector<8x1xi1>, vector<8x1xf32>
    %cst_13 = arith.constant dense<0.000000e+00> : vector<1xf32>
    %42 = vector.multi_reduction <add>, %41, %cst_13 [0] : vector<8x1xf32> to vector<1xf32>
    %43 = vector.shape_cast %42 : vector<1xf32> to vector<1x1xf32>
    %44 = vector.shape_cast %43 : vector<1x1xf32> to vector<1x1x1xf32>
    %c0_14 = arith.constant 0 : index
    %c0_15 = arith.constant 0 : index
    %c0_16 = arith.constant 0 : index
    %45 = vector.load %arg3[%c0_14, %c0_15, %c0_16] : memref<1x1x1xf32, #tpu.memory_space<vmem>>, vector<1x1x1xf32>
    tpu.vector_store %arg3[%c0_14, %c0_15, %c0_16], %44 {strides = array<i32>} : memref<1x1x1xf32, #tpu.memory_space<vmem>>, vector<1x1x1xf32>,
    return
  }
  func.func @transform_0(%arg0: i32) -> (i32, i32) {
    %c0_i32 = arith.constant 0 : i32
    %c0_i32_0 = arith.constant 0 : i32
    return %arg0, %c0_i32 : i32, i32
  }
  func.func @transform_1(%arg0: i32) -> (i32, i32) {
    %c0_i32 = arith.constant 0 : i32
    %c0_i32_0 = arith.constant 0 : i32
    return %arg0, %c0_i32 : i32, i32
  }
  func.func @transform_2(%arg0: i32) -> (i32, i32, i32) {
    %c0_i32 = arith.constant 0 : i32
    %c0_i32_0 = arith.constant 0 : i32
    %c0_i32_1 = arith.constant 0 : i32
    return %arg0, %c0_i32, %c0_i32_0 : i32, i32, i32
  }
}

</mosaic_0001>

<llo_original>
// kernel: tpu_custom_call.1
$region0: #{tpu_custom_call.1}
  #allocation0 [shape = 'u32[]', space=smem, size = 0x4, offset = 0x4, fixed_abs, tag = 'smem constant byte address 0x4 - core index']
  #allocation1 [shape = 'u32[144,128]{1,0:T(1,128)}', space=vmem, size = 0x12000, scoped, tag = 'internal scratch']
  %s0 = inlined_call_operand.vmem [shape: f32[8,32], index: 0, kind: input, shape index: {}]
  %s1 = inlined_call_operand.vmem [shape: s32[8,1], index: 1, kind: input, shape index: {}]
  %s2 = inlined_call_operand.hbm [shape: f32[1,1,1], index: 2, kind: output, shape index: {}]
  %s3 = sld [smem:[#allocation0]]
  $region18: #{tpu_custom_call.1} parent=0
    _
  %s5 = ssub.s32 1, %s3
  %s6 = scalar_select 0, %s5, %s3
  $region1: #{tpu_custom_call.1} parent=0
    #allocation2 [shape = 'u8[512]{0}', space=vmem, size = 0x400, scoped, tag = 'output window, operand 0, single buffered']
    #allocation3 [shape = 's32[1]{0}', space=sflag, size = 0x4, scoped, tag = 'scoped memory for tpu_custom_call.1']
    %7 = vsyncpa [#allocation3], 0
    // Predicated region
    $region2: #{tpu_custom_call.1} parent=1 // pred_check
      _
    $region3: #{tpu_custom_call.1} parent=1 // pred_check_branch
      %9 = sbr.rel (0) target = $region5
    $region4: #{tpu_custom_call.1} parent=1 // pred_region
      _
    $region5: #{tpu_custom_call.1} parent=1 // pred_fallthru
      _
    // Predicated region
    $region6: #{tpu_custom_call.1} parent=1 // pred_check
      _
    $region7: #{tpu_custom_call.1} parent=1 // pred_check_branch
      %11 = sbr.rel (0) target = $region9
    $region8: #{tpu_custom_call.1} parent=1 // pred_region
      _
    $region9: #{tpu_custom_call.1} parent=1 // pred_fallthru
      _
    %v12 = vld [vmem:[%s0] sm:$0xff]
    %v13 = vld [vmem:[%s1] sm:$0xff]
    %vm14 = vcmask 261120
    %v15 = vsel %vm14, %v12, -inf
    %16 = vmax.xlane.f32.xlu0 %v15
    %v17 = vpop.xlane.xlu0 %16
    %v18 = vsub.f32 %v12, %v17
    %v19 = vmul.f32 %v18, 1.442695
    %v20 = vpow.pop %v19
    %v21 = vlaneseq
    %v22 = vand.u32 %v21, 127
    %23 = vset.pattern.permute.xlu0 0
    %24 = vperm.xlu0 %23, %v13
    %v25 = vpop.permute.xlu0 %24
    %vm26 = vcmp.eq.s32.totalorder %v22, %v25
    %v27 = vsel %vm14, %v20, 0.0
    %28 = vadd.xlane.f32.xlu0 %v27
    %v29 = vpop.xlane.xlu0 %28
    %v30 = vsel %vm26, %v18, 0.0
    %v31 = vsel %vm14, %v30, 0.0
    %32 = vadd.xlane.f32.xlu0 %v31
    %v33 = vpop.xlane.xlu0 %32
    %v34 = vlog2.pop %v29
    %v35 = vmul.f32 %v34, 0.6931472
    %v36 = vsub.f32 %v35, %v33
    %v37 = vsub.f32 0.0, %v36
    %v38 = vmul.f32 %v37, 1.442695
    %v39 = vpow.pop %v38
    %v40 = vsub.f32 1.0, %v39
    %v41 = vmax.f32 %v40, 0.0
    %v42 = vpow.f32 %v41, 0.8
    %v43 = vmul.f32 %v42, 8.5
    %v44 = vmul.f32 %v43, %v36
    %v45 = vlaneseq
    %v46 = vshrl.u32 %v45, 7
    %s47 = smul.u32 0, 8
    %v48 = vstv %s47
    %v49 = vadd.s32 %v48, %v46
    %v50 = vadd.s32 %v49, %v22
    %vm51 = vcmp.lt.s32.totalorder %v50, 8
    %v52 = vsel %vm51, %v44, 0.0
    %vm53 = vcmask 7168
    %v54 = vsel %vm53, %v52, 0.0
    %v55 = vrot.slane %v54, 4
    %v56 = vadd.f32 %v54, %v55
    %v57 = vrot.slane %v56, 2
    %v58 = vadd.f32 %v56, %v57
    %v59 = vrot.slane %v58, 1
    %v60 = vadd.f32 %v58, %v59
    %vm61 = vcmask 0
    %62 = vst.msk [vmem:[#allocation2] sm:$0x1] %vm61, %v60
    // Predicated region
    $region10: #{tpu_custom_call.1} parent=1 // pred_check
      _
    $region11: #{tpu_custom_call.1} parent=1 // pred_check_branch
      %64 = sbr.rel (0) target = $region13
    $region12: #{tpu_custom_call.1} parent=1 // pred_region
      %s66 = ssub.s32 16, 16
      %67 = vsyncadd [#allocation3], %s66
      %s69 = sshll.u32 [#allocation2], 4
      %s70 = int_to_ptr.vmem [resolvable:$true] %s69
      %72 = dma.vmem_to_hbm [thread:$0]  %s70, 16, %s2, [#allocation3]
    $region13: #{tpu_custom_call.1} parent=1 // pred_fallthru
      _
    // Predicated region
    $region14: #{tpu_custom_call.1} parent=1 // pred_check
      _
    $region15: #{tpu_custom_call.1} parent=1 // pred_check_branch
      %74 = sbr.rel (0) target = $region17
    $region16: #{tpu_custom_call.1} parent=1 // pred_region
      %75 = dma.done [#allocation3], 16
    $region17: #{tpu_custom_call.1} parent=1 // pred_fallthru
      _
    %76 = vsyncpa [#allocation3], 1

</llo_original>
